<compile_context>
chip_gen: v7x
topology: tpu7x:2x2x1
jax: 0.10.0
libtpu: 0.0.40
codegen_flags: <defaults>
</compile_context>

<pallas_src>
import math

import jax
import jax.numpy as jnp
from jax.experimental import pallas as pl
from jax.experimental.pallas import tpu as pltpu


def _round_up(x: int, m: int) -> int:
    return ((x + m - 1) // m) * m


def _sin_pe_kernel(div_ref, sin_ref, cos_ref):
    """One (half, col_tile) tile of the transposed sinusoidal half-tables.

    sin_ref[i, p] = sin(p * div_term[i])
    cos_ref[i, p] = cos(p * div_term[i])
    Positions run along the lane (last) axis, so stores are 128-lane dense.
    """
    half, col_tile = sin_ref.shape
    col0 = pl.program_id(0) * col_tile
    # int32 iota + block offset, cast once -> exact position indices.
    pos = (col0 + jax.lax.broadcasted_iota(jnp.int32, (half, col_tile), 1)
           ).astype(jnp.float32)
    angle = div_ref[...] * pos           # (half, 1) * (half, col_tile)
    sin_ref[...] = jnp.sin(angle)        # 1 transcendental per output element
    cos_ref[...] = jnp.cos(angle)


def build_pe_table(d_model: int, max_len: int, col_tile: int = 512) -> jax.Array:
    """Builds the full (max_len, d_model) sinusoidal table; hot path in Pallas."""
    assert d_model % 2 == 0, "PyTorch reference requires even d_model"
    half = d_model // 2

    # Lane-dense tiling along the position axis; pad max_len up to the tile.
    col_tile = min(col_tile, _round_up(max_len, 128))
    padded_len = _round_up(max_len, col_tile)
    grid = padded_len // col_tile

    # Frequencies: computed once in plain JAX (d_model/2 exps total) and fed to
    # every grid step as a tiny (half, 1) VMEM input mapped to block (0, 0).
    div_col = jnp.exp(
        jnp.arange(0, d_model, 2, dtype=jnp.float32)
        * jnp.float32(-math.log(10000.0) / d_model))[:, None]

    sin_t, cos_t = pl.pallas_call(
        _sin_pe_kernel,
        out_shape=(jax.ShapeDtypeStruct((half, padded_len), jnp.float32),
                   jax.ShapeDtypeStruct((half, padded_len), jnp.float32)),
        grid_spec=pltpu.PrefetchScalarGridSpec(
            num_scalar_prefetch=0,
            grid=(grid,),
            in_specs=[pl.BlockSpec((half, 1), lambda i: (0, 0))],
            out_specs=[pl.BlockSpec((half, col_tile), lambda i: (0, i)),
                       pl.BlockSpec((half, col_tile), lambda i: (0, i))],
        ),
        compiler_params=pltpu.CompilerParams(
            dimension_semantics=("parallel",)),
    )(div_col)

    # One-time XLA glue: drop padding, transpose, interleave sin/cos columns.
    s = sin_t[:, :max_len].T                       # (max_len, half)
    c = cos_t[:, :max_len].T                       # (max_len, half)
    pe = jnp.stack([s, c], axis=-1).reshape(max_len, d_model)
    return pe


class SinPositionalEmbedding:
    """JAX/Pallas port of the PyTorch module (buffer built once, deterministic)."""

    def __init__(self, d_model: int, max_len: int = 5000):
        self.d_model = d_model
        self.max_len = max_len
        # pe: (1, max_len, d_model) float32, non-trainable buffer.
        self.pe = build_pe_table(d_model, max_len)[None, :, :]

    def __call__(self, x: jax.Array) -> jax.Array:
        # x: (batch, seq_len, d_model) -> (1, seq_len, d_model)
        # Forward is a pure buffer slice (no compute), done in plain JAX.
        seq_len = x.shape[1]
        return self.pe[:, :seq_len]


def _reference_pe(d_model: int, max_len: int) -> jnp.ndarray:
    """Plain-JAX reference mirroring the PyTorch __init__ exactly."""
    pe = jnp.zeros((max_len, d_model), dtype=jnp.float32)
    position = jnp.arange(0, max_len, dtype=jnp.float32)[:, None]
    div_term = jnp.exp(
        jnp.arange(0, d_model, 2, dtype=jnp.float32)
        * (-math.log(10000.0) / d_model))
    pe = pe.at[:, 0::2].set(jnp.sin(position * div_term))
    pe = pe.at[:, 1::2].set(jnp.cos(position * div_term))
    return pe[None]


if __name__ == "__main__":
    # --- Main test (matches the module's usage) ---
    batch, seq_len, d_model = 2, 8, 32
    max_len = 64

    key = jax.random.PRNGKey(0)
    x = jax.random.normal(key, (batch, seq_len, d_model), dtype=jnp.float32)

    module = SinPositionalEmbedding(d_model, max_len=max_len)
    out = jax.block_until_ready(module(x))

    assert out.shape == (1, seq_len, d_model), out.shape
    assert out.dtype == jnp.float32

    ref = _reference_pe(d_model, max_len)
    assert jnp.allclose(out, ref[:, :seq_len], atol=1e-5, rtol=1e-5), \
        float(jnp.max(jnp.abs(out - ref[:, :seq_len])))
    # Whole-table check at small angles (positions < 64).
    assert jnp.allclose(module.pe, ref, atol=1e-4, rtol=1e-4), \
        float(jnp.max(jnp.abs(module.pe - ref)))

    # --- Secondary test: exercises padding (700 -> 1024) and a 2-step grid ---
    d2, l2 = 64, 700
    pe2 = jax.block_until_ready(build_pe_table(d2, l2))
    ref2 = _reference_pe(d2, l2)[0]
    assert pe2.shape == (l2, d2) and pe2.dtype == jnp.float32
    # Looser tolerance: at positions up to ~700 the f32 argument reduction of
    # sin/cos may differ slightly between the Pallas and XLA lowerings.
    assert jnp.allclose(pe2, ref2, atol=5e-3, rtol=0), \
        float(jnp.max(jnp.abs(pe2 - ref2)))

    print("KERNEL_OK")
</pallas_src>

<mosaic_0001>
module attributes {stable_mosaic.version = 11 : i64} {
  func.func @_sin_pe_kernel(%arg0: i32, %arg1: memref<16x1xf32, #tpu.memory_space<vmem>>, %arg2: memref<16x128xf32, #tpu.memory_space<vmem>>, %arg3: memref<16x128xf32, #tpu.memory_space<vmem>>) attributes {dimension_semantics = [#tpu.dimension_semantics<parallel>], iteration_bounds = array<i64: 1>, scalar_prefetch = 0 : i64, scratch_operands = 0 : i64, tpu.core_type = #tpu.core_type<tc>, window_params = [{pipeline_mode = #tpu.pipeline_mode<synchronous>, transform_indices = @transform_0, window_bounds = array<i64: 16, 1>}, {transform_indices = @transform_1, window_bounds = array<i64: 16, 128>}, {transform_indices = @transform_2, window_bounds = array<i64: 16, 128>}]} {
    %c128_i32 = arith.constant 128 : i32
    %0 = arith.muli %arg0, %c128_i32 : i32
    %1 = tpu.iota {dimensions = array<i32: 1>} : vector<16x128xi32>
    %2 = vector.broadcast %0 : i32 to vector<16x128xi32>
    %3 = arith.addi %2, %1 : vector<16x128xi32>
    %4 = arith.sitofp %3 : vector<16x128xi32> to vector<16x128xf32>
    %c0 = arith.constant 0 : index
    %c0_0 = arith.constant 0 : index
    %5 = vector.load %arg1[%c0, %c0_0] : memref<16x1xf32, #tpu.memory_space<vmem>>, vector<16x1xf32>
    %6 = vector.broadcast %5 : vector<16x1xf32> to vector<16x128xf32>
    %7 = arith.mulf %6, %4 : vector<16x128xf32>
    %8 = math.sin %7 : vector<16x128xf32>
    %c0_1 = arith.constant 0 : index
    %c0_2 = arith.constant 0 : index
    %9 = vector.load %arg2[%c0_1, %c0_2] : memref<16x128xf32, #tpu.memory_space<vmem>>, vector<16x128xf32>
    tpu.vector_store %arg2[%c0_1, %c0_2], %8 {strides = array<i32>} : memref<16x128xf32, #tpu.memory_space<vmem>>, vector<16x128xf32>,
    %10 = math.cos %7 : vector<16x128xf32>
    %c0_3 = arith.constant 0 : index
    %c0_4 = arith.constant 0 : index
    %11 = vector.load %arg3[%c0_3, %c0_4] : memref<16x128xf32, #tpu.memory_space<vmem>>, vector<16x128xf32>
    tpu.vector_store %arg3[%c0_3, %c0_4], %10 {strides = array<i32>} : memref<16x128xf32, #tpu.memory_space<vmem>>, vector<16x128xf32>,
    return
  }
  func.func @transform_0(%arg0: i32) -> (i32, i32) {
    %c0_i32 = arith.constant 0 : i32
    %c0_i32_0 = arith.constant 0 : i32
    %c0_i32_1 = arith.constant 0 : i32
    return %c0_i32, %c0_i32_0 : i32, i32
  }
  func.func @transform_1(%arg0: i32) -> (i32, i32) {
    %c0_i32 = arith.constant 0 : i32
    %c0_i32_0 = arith.constant 0 : i32
    return %c0_i32, %arg0 : i32, i32
  }
  func.func @transform_2(%arg0: i32) -> (i32, i32) {
    %c0_i32 = arith.constant 0 : i32
    %c0_i32_0 = arith.constant 0 : i32
    return %c0_i32, %arg0 : i32, i32
  }
}

</mosaic_0001>

<llo_original>
// kernel: tpu_custom_call.1
$region0: #{tpu_custom_call.1}
  #allocation0 [shape = 'u32[]', space=smem, size = 0x4, offset = 0x4, fixed_abs, tag = 'smem constant byte address 0x4 - core index']
  #allocation1 [shape = 'u32[144,128]{1,0:T(1,128)}', space=vmem, size = 0x12000, scoped, tag = 'internal scratch']
  %s0 = inlined_call_operand.vmem [shape: f32[16,1], index: 0, kind: input, shape index: {}]
  %s1 = inlined_call_operand.hbm [shape: f32[16,128], index: 1, kind: output, shape index: {0}]
  %s2 = inlined_call_operand.hbm [shape: f32[16,128], index: 2, kind: output, shape index: {1}]
  %3 = xla_tuple %s1, %s2
  %s4 = sld [smem:[#allocation0]]
  $region22: #{tpu_custom_call.1} parent=0
    _
  %s6 = ssub.s32 1, %s4
  %s7 = scalar_select 0, %s6, %s4
  $region1: #{tpu_custom_call.1} parent=0
    #allocation2 [shape = 'u8[8192]{0}', space=vmem, size = 0x2000, scoped, tag = 'output window, operand 0, single buffered']
    #allocation3 [shape = 's32[1]{0}', space=sflag, size = 0x4, scoped, tag = 'scoped memory for tpu_custom_call.1']
    #allocation4 [shape = 'u8[8192]{0}', space=vmem, size = 0x2000, scoped, tag = 'output window, operand 1, single buffered']
    #allocation5 [shape = 's32[1]{0}', space=sflag, size = 0x4, scoped, tag = 'scoped memory for tpu_custom_call.1']
    %8 = vsyncpa [#allocation3], 0
    %9 = vsyncpa [#allocation5], 0
    // Predicated region
    $region2: #{tpu_custom_call.1} parent=1 // pred_check
      _
    $region3: #{tpu_custom_call.1} parent=1 // pred_check_branch
      %11 = sbr.rel (0) target = $region5
    $region4: #{tpu_custom_call.1} parent=1 // pred_region
      _
    $region5: #{tpu_custom_call.1} parent=1 // pred_fallthru
      _
    %s12 = smul.u32 0, 128
    %v13 = vlaneseq
    %v14 = vand.u32 %v13, 127
    %v15 = vstv %s12
    %v16 = vadd.s32 %v15, %v14
    %v17 = vcvt.s32.f32 %v16
    %v18 = vld [vmem:[%s0] sm:$0xff]
    %v19 = vld [vmem:[%s0 + $0x8] sm:$0xff]
    %21 = vset.pattern.permute.xlu0 0
    %22 = vperm.xlu0 %21, %v18
    %v23 = vpop.permute.xlu0 %22
    %26 = vset.pattern.permute.xlu0 0
    %27 = vperm.xlu0 %26, %v19
    %v28 = vpop.permute.xlu0 %27
    %v30 = vmul.f32 %v23, %v17
    %v31 = vmul.f32 %v28, %v17
    %v32 = vand.u32 2147483647, %v30
    %vm33 = vcmp.le.f32.partialorder %v32, 0.7853982
    %vm34 = vcmp.lt.s32.totalorder %v30, 0
    %v35 = vand.u32 %v30, 2139095040
    %v36 = vshrl.u32 %v35, 23
    %v37 = vsub.s32 %v36, 127
    %v38 = vand.u32 2147483647, %v30
    %v39 = vand.u32 %v38, 8388607
    %v40 = vor.u32 %v39, 8388608
    %v41 = vsub.s32 0, %v40
    %v42 = vadd.s32 %v37, 1
    %vm43 = vcmp.gt.s32.totalorder %v42, 0
    %v44 = vsel %vm43, %v42, 0
    %v45 = vshrl.u32 %v44, 5
    %v46 = vand.u32 %v44, 31
    %v47 = vsub.s32 32, %v46
    %v48 = vshrl.u32 683565275, %v47
    %v49 = vshll.u32 683565275, %v46
    %v50 = vshrl.u32 2475754826, %v47
    %v51 = vor.u32 %v49, %v50
    %v52 = vshll.u32 2475754826, %v46
    %v53 = vshrl.u32 2131351028, %v47
    %v54 = vor.u32 %v52, %v53
    %v55 = vshll.u32 2131351028, %v46
    %v56 = vshrl.u32 2102212464, %v47
    %v57 = vor.u32 %v55, %v56
    %v58 = vshll.u32 2102212464, %v46
    %v59 = vshrl.u32 920167782, %v47
    %v60 = vor.u32 %v58, %v59
    %v61 = vshll.u32 920167782, %v46
    %v62 = vshrl.u32 1326507024, %v47
    %v63 = vor.u32 %v61, %v62
    %vm64 = vcmp.lt.s32.totalorder %v45, 1
    %vm65 = vcmp.lt.s32.totalorder %v45, 2
    %vm66 = vcmp.lt.s32.totalorder %v45, 3
    %vm67 = vcmp.lt.s32.totalorder %v45, 4
    %v68 = vsel %vm64, %v48, %v51
    %v69 = vsel %vm67, %v57, 2102212464
    %v70 = vsel %vm66, %v54, %v69
    %v71 = vsel %vm65, %v68, %v70
    %v72 = vsel %vm64, %v51, %v54
    %v73 = vsel %vm67, %v60, 920167782
    %v74 = vsel %vm66, %v57, %v73
    %v75 = vsel %vm65, %v72, %v74
    %v76 = vsel %vm64, %v54, %v57
    %v77 = vsel %vm67, %v63, 1326507024
    %v78 = vsel %vm66, %v60, %v77
    %v79 = vsel %vm65, %v76, %v78
    %v80 = vshll.u32 %v40, 8
    %v81 = vmul.u32.u64.compose %v80, %v79
    %v82 = vextract.low.u32 %v81
    %v83 = vextract.high.u32 %v81
    %v84 = vmul.u32.u64.compose %v80, %v75
    %v85 = vextract.low.u32 %v84
    %v86 = vextract.high.u32 %v84
    %v87 = vmul.u32 %v80, %v71
    %v88 = vadd.s32 %v83, %v85
    %vm89 = vc.u32 %v83, %v85
    %v90 = vadd.s32 %v86, 1
    %v91 = vsel %vm89, %v90, %v86
    %v92 = vadd.s32 %v87, %v91
    %v93 = vadd.s32 %v92, 536870912
    %v94 = vshrl.u32 %v93, 30
    %v95 = vshll.u32 %v94, 30
    %v96 = vsub.s32 %v92, %v95
    %vm97 = vcmp.lt.s32.totalorder %v96, 0
    %v98 = vsub.s32 0, %v96
    %v99 = vsel %vm97, %v98, %v96
    %v100 = vclz %v99
    %v101 = vsub.s32 %v100, 2
    %vm102 = vcmp.gt.s32.totalorder 0, %v101
    %v103 = vsel %vm102, 0, %v101
    %v104 = vsub.s32 32, %v103
    %v105 = vshll.u32 %v96, %v103
    %v106 = vshrl.u32 %v88, %v104
    %v107 = vor.u32 %v105, %v106
    %v108 = vsub.s32 4294967266, %v103
    %v109 = vadd.s32 %v108, 127
    %v110 = vshll.u32 %v109, 23
    %v111 = vor.u32 4788187, %v110
    %v112 = vand.u32 2147483647, %v111
    %v114 = vcvt.s32.f32 %v107
    %v115 = vmul.f32 %v114, %v112
    %v116 = vxor.u32 %v115, 2147483648
    %v117 = vsel %vm34, %v116, %v115
    %v118 = vsub.s32 4, %v94
    %v119 = vsel %vm34, %v118, %v94
    %v120 = vsel %vm33, %v30, %v117
    %v121 = vsel %vm33, 0, %v119
    %v122 = vcosq.f32.pop %v120
    %v123 = vsinq.f32.pop %v120
    %vm124 = vweird.f32 %v30
    %v125 = vadd.s32 %v121, 3
    %v126 = vand.u32 %v125, 3
    %vm127 = vcmp.lt.s32.totalorder %v126, 2
    %vm128 = vcmp.eq.s32.totalorder %v126, 0
    %v129 = vxor.u32 %v123, 2147483648
    %v130 = vsel %vm128, %v122, %v129
    %vm131 = vcmp.eq.s32.totalorder %v126, 2
    %v132 = vxor.u32 %v122, 2147483648
    %v133 = vsel %vm131, %v132, %v123
    %v134 = vsel %vm127, %v130, %v133
    %v135 = vsel %vm124, nan, %v134
    %v136 = vand.u32 2147483647, %v31
    %vm137 = vcmp.le.f32.partialorder %v136, 0.7853982
    %vm138 = vcmp.lt.s32.totalorder %v31, 0
    %v139 = vand.u32 %v31, 2139095040
    %v140 = vshrl.u32 %v139, 23
    %v141 = vsub.s32 %v140, 127
    %v142 = vand.u32 2147483647, %v31
    %v143 = vand.u32 %v142, 8388607
    %v144 = vor.u32 %v143, 8388608
    %v145 = vsub.s32 0, %v144
    %v146 = vadd.s32 %v141, 1
    %vm147 = vcmp.gt.s32.totalorder %v146, 0
    %v148 = vsel %vm147, %v146, 0
    %v149 = vshrl.u32 %v148, 5
    %v150 = vand.u32 %v148, 31
    %v151 = vsub.s32 32, %v150
    %v152 = vshrl.u32 683565275, %v151
    %v153 = vshll.u32 683565275, %v150
    %v154 = vshrl.u32 2475754826, %v151
    %v155 = vor.u32 %v153, %v154
    %v156 = vshll.u32 2475754826, %v150
    %v157 = vshrl.u32 2131351028, %v151
    %v158 = vor.u32 %v156, %v157
    %v159 = vshll.u32 2131351028, %v150
    %v160 = vshrl.u32 2102212464, %v151
    %v161 = vor.u32 %v159, %v160
    %v162 = vshll.u32 2102212464, %v150
    %v163 = vshrl.u32 920167782, %v151
    %v164 = vor.u32 %v162, %v163
    %v165 = vshll.u32 920167782, %v150
    %v166 = vshrl.u32 1326507024, %v151
    %v167 = vor.u32 %v165, %v166
    %vm168 = vcmp.lt.s32.totalorder %v149, 1
    %vm169 = vcmp.lt.s32.totalorder %v149, 2
    %vm170 = vcmp.lt.s32.totalorder %v149, 3
    %vm171 = vcmp.lt.s32.totalorder %v149, 4
    %v172 = vsel %vm168, %v152, %v155
    %v173 = vsel %vm171, %v161, 2102212464
    %v174 = vsel %vm170, %v158, %v173
    %v175 = vsel %vm169, %v172, %v174
    %v176 = vsel %vm168, %v155, %v158
    %v177 = vsel %vm171, %v164, 920167782
    %v178 = vsel %vm170, %v161, %v177
    %v179 = vsel %vm169, %v176, %v178
    %v180 = vsel %vm168, %v158, %v161
    %v181 = vsel %vm171, %v167, 1326507024
    %v182 = vsel %vm170, %v164, %v181
    %v183 = vsel %vm169, %v180, %v182
    %v184 = vshll.u32 %v144, 8
    %v185 = vmul.u32.u64.compose %v184, %v183
    %v186 = vextract.low.u32 %v185
    %v187 = vextract.high.u32 %v185
    %v188 = vmul.u32.u64.compose %v184, %v179
    %v189 = vextract.low.u32 %v188
    %v190 = vextract.high.u32 %v188
    %v191 = vmul.u32 %v184, %v175
    %v192 = vadd.s32 %v187, %v189
    %vm193 = vc.u32 %v187, %v189
    %v194 = vadd.s32 %v190, 1
    %v195 = vsel %vm193, %v194, %v190
    %v196 = vadd.s32 %v191, %v195
    %v197 = vadd.s32 %v196, 536870912
    %v198 = vshrl.u32 %v197, 30
    %v199 = vshll.u32 %v198, 30
    %v200 = vsub.s32 %v196, %v199
    %vm201 = vcmp.lt.s32.totalorder %v200, 0
    %v202 = vsub.s32 0, %v200
    %v203 = vsel %vm201, %v202, %v200
    %v204 = vclz %v203
    %v205 = vsub.s32 %v204, 2
    %vm206 = vcmp.gt.s32.totalorder 0, %v205
    %v207 = vsel %vm206, 0, %v205
    %v208 = vsub.s32 32, %v207
    %v209 = vshll.u32 %v200, %v207
    %v210 = vshrl.u32 %v192, %v208
    %v211 = vor.u32 %v209, %v210
    %v212 = vsub.s32 4294967266, %v207
    %v213 = vadd.s32 %v212, 127
    %v214 = vshll.u32 %v213, 23
    %v215 = vor.u32 4788187, %v214
    %v216 = vand.u32 2147483647, %v215
    %v218 = vcvt.s32.f32 %v211
    %v219 = vmul.f32 %v218, %v216
    %v220 = vxor.u32 %v219, 2147483648
    %v221 = vsel %vm138, %v220, %v219
    %v222 = vsub.s32 4, %v198
    %v223 = vsel %vm138, %v222, %v198
    %v224 = vsel %vm137, %v31, %v221
    %v225 = vsel %vm137, 0, %v223
    %v226 = vcosq.f32.pop %v224
    %v227 = vsinq.f32.pop %v224
    %vm228 = vweird.f32 %v31
    %v229 = vadd.s32 %v225, 3
    %v230 = vand.u32 %v229, 3
    %vm231 = vcmp.lt.s32.totalorder %v230, 2
    %vm232 = vcmp.eq.s32.totalorder %v230, 0
    %v233 = vxor.u32 %v227, 2147483648
    %v234 = vsel %vm232, %v226, %v233
    %vm235 = vcmp.eq.s32.totalorder %v230, 2
    %v236 = vxor.u32 %v226, 2147483648
    %v237 = vsel %vm235, %v236, %v227
    %v238 = vsel %vm231, %v234, %v237
    %v239 = vsel %vm228, nan, %v238
    %240 = vst [vmem:[#allocation2] sm:$0xff] %v135
    %241 = vst [vmem:[#allocation2 + $0x8] sm:$0xff] %v239
    %v242 = vand.u32 2147483647, %v30
    %vm243 = vcmp.le.f32.partialorder %v242, 0.7853982
    %vm244 = vcmp.lt.s32.totalorder %v30, 0
    %v245 = vand.u32 %v30, 2139095040
    %v246 = vshrl.u32 %v245, 23
    %v247 = vsub.s32 %v246, 127
    %v248 = vand.u32 2147483647, %v30
    %v249 = vand.u32 %v248, 8388607
    %v250 = vor.u32 %v249, 8388608
    %v251 = vsub.s32 0, %v250
    %v252 = vadd.s32 %v247, 1
    %vm253 = vcmp.gt.s32.totalorder %v252, 0
    %v254 = vsel %vm253, %v252, 0
    %v255 = vshrl.u32 %v254, 5
    %v256 = vand.u32 %v254, 31
    %v257 = vsub.s32 32, %v256
    %v258 = vshrl.u32 683565275, %v257
    %v259 = vshll.u32 683565275, %v256
    %v260 = vshrl.u32 2475754826, %v257
    %v261 = vor.u32 %v259, %v260
    %v262 = vshll.u32 2475754826, %v256
    %v263 = vshrl.u32 2131351028, %v257
    %v264 = vor.u32 %v262, %v263
    %v265 = vshll.u32 2131351028, %v256
    %v266 = vshrl.u32 2102212464, %v257
    %v267 = vor.u32 %v265, %v266
    %v268 = vshll.u32 2102212464, %v256
    %v269 = vshrl.u32 920167782, %v257
    %v270 = vor.u32 %v268, %v269
    %v271 = vshll.u32 920167782, %v256
    %v272 = vshrl.u32 1326507024, %v257
    %v273 = vor.u32 %v271, %v272
    %vm274 = vcmp.lt.s32.totalorder %v255, 1
    %vm275 = vcmp.lt.s32.totalorder %v255, 2
    %vm276 = vcmp.lt.s32.totalorder %v255, 3
    %vm277 = vcmp.lt.s32.totalorder %v255, 4
    %v278 = vsel %vm274, %v258, %v261
    %v279 = vsel %vm277, %v267, 2102212464
    %v280 = vsel %vm276, %v264, %v279
    %v281 = vsel %vm275, %v278, %v280
    %v282 = vsel %vm274, %v261, %v264
    %v283 = vsel %vm277, %v270, 920167782
    %v284 = vsel %vm276, %v267, %v283
    %v285 = vsel %vm275, %v282, %v284
    %v286 = vsel %vm274, %v264, %v267
    %v287 = vsel %vm277, %v273, 1326507024
    %v288 = vsel %vm276, %v270, %v287
    %v289 = vsel %vm275, %v286, %v288
    %v290 = vshll.u32 %v250, 8
    %v291 = vmul.u32.u64.compose %v290, %v289
    %v292 = vextract.low.u32 %v291
    %v293 = vextract.high.u32 %v291
    %v294 = vmul.u32.u64.compose %v290, %v285
    %v295 = vextract.low.u32 %v294
    %v296 = vextract.high.u32 %v294
    %v297 = vmul.u32 %v290, %v281
    %v298 = vadd.s32 %v293, %v295
    %vm299 = vc.u32 %v293, %v295
    %v300 = vadd.s32 %v296, 1
    %v301 = vsel %vm299, %v300, %v296
    %v302 = vadd.s32 %v297, %v301
    %v303 = vadd.s32 %v302, 536870912
    %v304 = vshrl.u32 %v303, 30
    %v305 = vshll.u32 %v304, 30
    %v306 = vsub.s32 %v302, %v305
    %vm307 = vcmp.lt.s32.totalorder %v306, 0
    %v308 = vsub.s32 0, %v306
    %v309 = vsel %vm307, %v308, %v306
    %v310 = vclz %v309
    %v311 = vsub.s32 %v310, 2
    %vm312 = vcmp.gt.s32.totalorder 0, %v311
    %v313 = vsel %vm312, 0, %v311
    %v314 = vsub.s32 32, %v313
    %v315 = vshll.u32 %v306, %v313
    %v316 = vshrl.u32 %v298, %v314
    %v317 = vor.u32 %v315, %v316
    %v318 = vsub.s32 4294967266, %v313
    %v319 = vadd.s32 %v318, 127
    %v320 = vshll.u32 %v319, 23
    %v321 = vor.u32 4788187, %v320
    %v322 = vand.u32 2147483647, %v321
    %v324 = vcvt.s32.f32 %v317
    %v325 = vmul.f32 %v324, %v322
    %v326 = vxor.u32 %v325, 2147483648
    %v327 = vsel %vm244, %v326, %v325
    %v328 = vsub.s32 4, %v304
    %v329 = vsel %vm244, %v328, %v304
    %v330 = vsel %vm243, %v30, %v327
    %v331 = vsel %vm243, 0, %v329
    %v332 = vcosq.f32.pop %v330
    %v333 = vsinq.f32.pop %v330
    %vm334 = vweird.f32 %v30
    %v335 = vand.u32 %v331, 3
    %vm336 = vcmp.lt.s32.totalorder %v335, 2
    %vm337 = vcmp.eq.s32.totalorder %v335, 0
    %v338 = vxor.u32 %v333, 2147483648
    %v339 = vsel %vm337, %v332, %v338
    %vm340 = vcmp.eq.s32.totalorder %v335, 2
    %v341 = vxor.u32 %v332, 2147483648
    %v342 = vsel %vm340, %v341, %v333
    %v343 = vsel %vm336, %v339, %v342
    %v344 = vsel %vm334, nan, %v343
    %v345 = vand.u32 2147483647, %v31
    %vm346 = vcmp.le.f32.partialorder %v345, 0.7853982
    %vm347 = vcmp.lt.s32.totalorder %v31, 0
    %v348 = vand.u32 %v31, 2139095040
    %v349 = vshrl.u32 %v348, 23
    %v350 = vsub.s32 %v349, 127
    %v351 = vand.u32 2147483647, %v31
    %v352 = vand.u32 %v351, 8388607
    %v353 = vor.u32 %v352, 8388608
    %v354 = vsub.s32 0, %v353
    %v355 = vadd.s32 %v350, 1
    %vm356 = vcmp.gt.s32.totalorder %v355, 0
    %v357 = vsel %vm356, %v355, 0
    %v358 = vshrl.u32 %v357, 5
    %v359 = vand.u32 %v357, 31
    %v360 = vsub.s32 32, %v359
    %v361 = vshrl.u32 683565275, %v360
    %v362 = vshll.u32 683565275, %v359
    %v363 = vshrl.u32 2475754826, %v360
    %v364 = vor.u32 %v362, %v363
    %v365 = vshll.u32 2475754826, %v359
    %v366 = vshrl.u32 2131351028, %v360
    %v367 = vor.u32 %v365, %v366
    %v368 = vshll.u32 2131351028, %v359
    %v369 = vshrl.u32 2102212464, %v360
    %v370 = vor.u32 %v368, %v369
    %v371 = vshll.u32 2102212464, %v359
    %v372 = vshrl.u32 920167782, %v360
    %v373 = vor.u32 %v371, %v372
    %v374 = vshll.u32 920167782, %v359
    %v375 = vshrl.u32 1326507024, %v360
    %v376 = vor.u32 %v374, %v375
    %vm377 = vcmp.lt.s32.totalorder %v358, 1
    %vm378 = vcmp.lt.s32.totalorder %v358, 2
    %vm379 = vcmp.lt.s32.totalorder %v358, 3
    %vm380 = vcmp.lt.s32.totalorder %v358, 4
    %v381 = vsel %vm377, %v361, %v364
    %v382 = vsel %vm380, %v370, 2102212464
    %v383 = vsel %vm379, %v367, %v382
    %v384 = vsel %vm378, %v381, %v383
    %v385 = vsel %vm377, %v364, %v367
    %v386 = vsel %vm380, %v373, 920167782
    %v387 = vsel %vm379, %v370, %v386
    %v388 = vsel %vm378, %v385, %v387
    %v389 = vsel %vm377, %v367, %v370
    %v390 = vsel %vm380, %v376, 1326507024
    %v391 = vsel %vm379, %v373, %v390
    %v392 = vsel %vm378, %v389, %v391
    %v393 = vshll.u32 %v353, 8
    %v394 = vmul.u32.u64.compose %v393, %v392
    %v395 = vextract.low.u32 %v394
    %v396 = vextract.high.u32 %v394
    %v397 = vmul.u32.u64.compose %v393, %v388
    %v398 = vextract.low.u32 %v397
    %v399 = vextract.high.u32 %v397
    %v400 = vmul.u32 %v393, %v384
    %v401 = vadd.s32 %v396, %v398
    %vm402 = vc.u32 %v396, %v398
    %v403 = vadd.s32 %v399, 1
    %v404 = vsel %vm402, %v403, %v399
    %v405 = vadd.s32 %v400, %v404
    %v406 = vadd.s32 %v405, 536870912
    %v407 = vshrl.u32 %v406, 30
    %v408 = vshll.u32 %v407, 30
    %v409 = vsub.s32 %v405, %v408
    %vm410 = vcmp.lt.s32.totalorder %v409, 0
    %v411 = vsub.s32 0, %v409
    %v412 = vsel %vm410, %v411, %v409
    %v413 = vclz %v412
    %v414 = vsub.s32 %v413, 2
    %vm415 = vcmp.gt.s32.totalorder 0, %v414
    %v416 = vsel %vm415, 0, %v414
    %v417 = vsub.s32 32, %v416
    %v418 = vshll.u32 %v409, %v416
    %v419 = vshrl.u32 %v401, %v417
    %v420 = vor.u32 %v418, %v419
    %v421 = vsub.s32 4294967266, %v416
    %v422 = vadd.s32 %v421, 127
    %v423 = vshll.u32 %v422, 23
    %v424 = vor.u32 4788187, %v423
    %v425 = vand.u32 2147483647, %v424
    %v427 = vcvt.s32.f32 %v420
    %v428 = vmul.f32 %v427, %v425
    %v429 = vxor.u32 %v428, 2147483648
    %v430 = vsel %vm347, %v429, %v428
    %v431 = vsub.s32 4, %v407
    %v432 = vsel %vm347, %v431, %v407
    %v433 = vsel %vm346, %v31, %v430
    %v434 = vsel %vm346, 0, %v432
    %v435 = vcosq.f32.pop %v433
    %v436 = vsinq.f32.pop %v433
    %vm437 = vweird.f32 %v31
    %v438 = vand.u32 %v434, 3
    %vm439 = vcmp.lt.s32.totalorder %v438, 2
    %vm440 = vcmp.eq.s32.totalorder %v438, 0
    %v441 = vxor.u32 %v436, 2147483648
    %v442 = vsel %vm440, %v435, %v441
    %vm443 = vcmp.eq.s32.totalorder %v438, 2
    %v444 = vxor.u32 %v435, 2147483648
    %v445 = vsel %vm443, %v444, %v436
    %v446 = vsel %vm439, %v442, %v445
    %v447 = vsel %vm437, nan, %v446
    %448 = vst [vmem:[#allocation4] sm:$0xff] %v344
    %449 = vst [vmem:[#allocation4 + $0x8] sm:$0xff] %v447
    // Predicated region
    $region6: #{tpu_custom_call.1} parent=1 // pred_check
      _
    $region7: #{tpu_custom_call.1} parent=1 // pred_check_branch
      %451 = sbr.rel (0) target = $region9
    $region8: #{tpu_custom_call.1} parent=1 // pred_region
      %s453 = ssub.s32 256, 256
      %454 = vsyncadd [#allocation3], %s453
      %s455 = sshll.u32 [#allocation2], 4
      %s456 = int_to_ptr.vmem [resolvable:$true] %s455
      %461 = dma.vmem_to_hbm [thread:$0]  %s456, 256, %s1, [#allocation3], 128, 128, 8
    $region9: #{tpu_custom_call.1} parent=1 // pred_fallthru
      _
    // Predicated region
    $region10: #{tpu_custom_call.1} parent=1 // pred_check
      _
    $region11: #{tpu_custom_call.1} parent=1 // pred_check_branch
      %463 = sbr.rel (0) target = $region13
    $region12: #{tpu_custom_call.1} parent=1 // pred_region
      %s465 = ssub.s32 256, 256
      %466 = vsyncadd [#allocation5], %s465
      %s467 = sshll.u32 [#allocation4], 4
      %s468 = int_to_ptr.vmem [resolvable:$true] %s467
      %473 = dma.vmem_to_hbm [thread:$0]  %s468, 256, %s2, [#allocation5], 128, 128, 8
    $region13: #{tpu_custom_call.1} parent=1 // pred_fallthru
      _
    // Predicated region
    $region14: #{tpu_custom_call.1} parent=1 // pred_check
      _
    $region15: #{tpu_custom_call.1} parent=1 // pred_check_branch
      %475 = sbr.rel (0) target = $region17
    $region16: #{tpu_custom_call.1} parent=1 // pred_region
      %476 = dma.done [#allocation3], 256
    $region17: #{tpu_custom_call.1} parent=1 // pred_fallthru
      _
    // Predicated region
    $region18: #{tpu_custom_call.1} parent=1 // pred_check
      _
    $region19: #{tpu_custom_call.1} parent=1 // pred_check_branch
      %478 = sbr.rel (0) target = $region21
    $region20: #{tpu_custom_call.1} parent=1 // pred_region
      %479 = dma.done [#allocation5], 256
    $region21: #{tpu_custom_call.1} parent=1 // pred_fallthru
      _
    %480 = vsyncpa [#allocation3], 1
    %481 = vsyncpa [#allocation5], 1

</llo_original>
